<compile_context>
chip_gen: v5e
topology: v5e:2x2
jax: 0.10.0
libtpu: 0.0.40
codegen_flags: <defaults>
</compile_context>

<pallas_src>
import functools

import jax
import jax.numpy as jnp
from jax import lax
from jax.experimental import pallas as pl
from jax.experimental.pallas import tpu as pltpu

LANES = 128
ROW_ALIGN = 8            # kernel handles row counts that are multiples of 8 (f32 tile)
MAX_BLOCK_ROWS = 8192    # (8192, 128) f32 = 4 MiB per input tile


def _hw_config():
    """(max_block_rows, vmem_limit_bytes) chosen per TPU generation."""
    vmem = 64 << 20                              # conservative default (v7x: 64 MiB/TC)
    try:
        vmem = int(pltpu.get_tpu_info().vmem_capacity_bytes)
    except Exception:
        pass
    if vmem >= (100 << 20):                      # v5e / v6e: 128 MiB VMEM per core
        return MAX_BLOCK_ROWS, 80 << 20
    return MAX_BLOCK_ROWS, 48 << 20              # v7x: 64 MiB VMEM per core


def _focal_terms(x, t, gamma):
    """Elementwise (1 - pt)**gamma * BCE in f32 (alpha applied by the caller)."""
    x = x.astype(jnp.float32)
    t = t.astype(jnp.float32)
    s = jnp.exp(-jnp.abs(x))                     # EUP
    a = jnp.maximum(x, 0.0) - x * t              # >= 0 for t in [0, 1]
    bce = a + jnp.log1p(s)                       # StableBCELoss / BCE-with-logits
    pt = jnp.exp(-a) / (1.0 + s)                 # == exp(-bce); independent of log1p
    q = 1.0 - pt
    g = float(gamma)
    if g.is_integer() and g >= 0:
        focal = lax.integer_pow(q, int(g))       # gamma=2 default: pure VALU
    else:
        focal = jnp.maximum(q, 0.0) ** gamma     # clamp avoids NaN from rounding
    return focal * bce


def _focal_sum_kernel(x_ref, t_ref, o_ref, *, gamma, rows, block_rows,
                      steps_per_split, acc_rows, needs_mask):
    sp = pl.program_id(0)        # "parallel" split axis (v7x megacore)
    j = pl.program_id(1)         # "arbitrary" streaming/reduction axis

    @pl.when(j == 0)
    def _init():
        o_ref[...] = jnp.zeros_like(o_ref)

    f = _focal_terms(x_ref[...], t_ref[...], gamma)

    if needs_mask:
        # Ragged last block / overshoot blocks contribute exactly 0.
        g = sp * steps_per_split + j                        # logical (unclamped) block
        valid = rows - g * block_rows
        rid = lax.broadcasted_iota(jnp.int32, f.shape, 0)
        f = jnp.where(rid < valid, f, 0.0)

    # Reduce the tile into acc_rows//8 independent (8,128) vregs and accumulate
    # elementwise into the resident output block; the single cross-lane reduce
    # happens on a few KiB outside the kernel.
    partial = f.reshape(block_rows // acc_rows, acc_rows, LANES).sum(axis=0)
    o_ref[...] += partial[None, :, :]


def focal_loss(inputs, targets, alpha=1.0, gamma=2.0, reduce=True,
               _block_rows_cap=None):
    """FocalLoss.forward. logits=True/False are the same stable formula."""
    x = jnp.asarray(inputs)
    t = jnp.asarray(targets)

    if not reduce:
        # TODO(synk): unreduced path is a pure elementwise map; kept in plain JAX.
        return (jnp.float32(alpha) * _focal_terms(x, t, gamma)).reshape(x.shape)

    x = x.reshape(-1)
    t = t.reshape(-1)
    if x.dtype not in (jnp.float32, jnp.bfloat16):
        x = x.astype(jnp.float32)
    if t.dtype not in (jnp.float32, jnp.bfloat16):
        t = t.astype(jnp.float32)
    n = x.shape[0]

    max_rows, vmem_limit = _hw_config()
    if _block_rows_cap is not None:              # test hook (multiple of ROW_ALIGN)
        max_rows = _block_rows_cap

    rows_all = n // LANES
    rows_kernel = (rows_all // ROW_ALIGN) * ROW_ALIGN    # rows handled by the kernel
    n_kernel = rows_kernel * LANES
    total = jnp.float32(0.0)

    if rows_kernel > 0:
        # Copy-free when n is a multiple of ROW_ALIGN*LANES (the common case for
        # NCHW tensors); otherwise the prefix slice is materialized once.
        # TODO(synk): a fully copy-free path for arbitrary sizes would need a 1-D /
        # element-indexed BlockSpec for the non-aligned remainder.
        xm = (x if n_kernel == n else x[:n_kernel]).reshape(rows_kernel, LANES)
        tm = (t if n_kernel == n else t[:n_kernel]).reshape(rows_kernel, LANES)

        block_rows = min(max_rows, rows_kernel)          # multiple of 8, <= rows
        acc_rows = 32 if block_rows % 32 == 0 else 8
        nblocks = pl.cdiv(rows_kernel, block_rows)
        num_splits = 2 if nblocks >= 2 else 1            # v7x: one split per core
        steps = pl.cdiv(nblocks, num_splits)
        needs_mask = (num_splits * steps * block_rows != rows_kernel)

        if num_splits * steps == nblocks:
            def in_map(sp, j):
                return (sp * steps + j, 0)
        else:
            def in_map(sp, j):                           # overshoot blocks re-read the
                return (jnp.minimum(sp * steps + j, nblocks - 1), 0)   # last block and
                                                                       # are masked to 0
        kernel = functools.partial(
            _focal_sum_kernel, gamma=float(gamma), rows=rows_kernel,
            block_rows=block_rows, steps_per_split=steps,
            acc_rows=acc_rows, needs_mask=needs_mask)

        partials = pl.pallas_call(
            kernel,
            out_shape=jax.ShapeDtypeStruct((num_splits, acc_rows, LANES), jnp.float32),
            grid_spec=pltpu.PrefetchScalarGridSpec(
                num_scalar_prefetch=0,
                grid=(num_splits, steps),
                in_specs=[
                    pl.BlockSpec((block_rows, LANES), in_map),
                    pl.BlockSpec((block_rows, LANES), in_map),
                ],
                out_specs=pl.BlockSpec((1, acc_rows, LANES),
                                       lambda sp, j: (sp, 0, 0)),
            ),
            compiler_params=pltpu.CompilerParams(
                dimension_semantics=("parallel", "arbitrary"),
                vmem_limit_bytes=vmem_limit),
        )(xm, tm)
        total = total + jnp.sum(partials)

    if n_kernel < n:
        # Sub-block / sub-lane tail (< ROW_ALIGN*LANES + LANES elements): plain JAX.
        total = total + jnp.sum(_focal_terms(x[n_kernel:], t[n_kernel:], gamma))

    return jnp.float32(alpha) * total / jnp.float32(n)


def _ref_focal(x, t, alpha=1.0, gamma=2.0):
    """Pure-JAX reference mirroring the PyTorch module."""
    x = x.astype(jnp.float32)
    t = t.astype(jnp.float32)
    bce = jnp.maximum(x, 0.0) - x * t + jnp.log1p(jnp.exp(-jnp.abs(x)))
    pt = jnp.exp(-bce)
    return jnp.mean(alpha * (1.0 - pt) ** gamma * bce)


if __name__ == "__main__":
    key = jax.random.PRNGKey(0)
    k1, k2, k3, k4, k5, k6 = jax.random.split(key, 6)

    # FocalLoss has no learnable parameters (alpha, gamma are plain scalars).
    # Example inputs: NCHW segmentation scores + binary targets.
    x = jax.random.normal(k1, (2, 4, 16, 16), dtype=jnp.float32)
    t = jax.random.bernoulli(k2, 0.5, (2, 4, 16, 16)).astype(jnp.float32)

    loss = focal_loss(x, t, alpha=1.0, gamma=2.0)
    jax.block_until_ready(loss)
    ref = _ref_focal(x, t, alpha=1.0, gamma=2.0)
    assert jnp.allclose(loss, ref, rtol=1e-4, atol=1e-6), (loss, ref)

    # Ragged flat size (not a multiple of 128): exercises the plain-JAX tail path.
    xr = jax.random.normal(k3, (3, 5, 7, 9), dtype=jnp.float32)
    tr = jax.random.bernoulli(k4, 0.5, (3, 5, 7, 9)).astype(jnp.float32)
    loss_r = focal_loss(xr, tr, alpha=0.5, gamma=2.0)
    jax.block_until_ready(loss_r)
    ref_r = _ref_focal(xr, tr, alpha=0.5, gamma=2.0)
    assert jnp.allclose(loss_r, ref_r, rtol=1e-4, atol=1e-6), (loss_r, ref_r)

    # Small-tile override: exercises multi-block streaming, the 2-way parallel split,
    # the clamped index map and the in-kernel row mask at a small size.
    xs = jax.random.normal(k5, (2, 5, 32, 32), dtype=jnp.float32)      # 80 rows of 128
    ts = jax.random.bernoulli(k6, 0.5, (2, 5, 32, 32)).astype(jnp.float32)
    loss_s = focal_loss(xs, ts, alpha=1.0, gamma=2.0, _block_rows_cap=16)
    jax.block_until_ready(loss_s)
    ref_s = _ref_focal(xs, ts, alpha=1.0, gamma=2.0)
    assert jnp.allclose(loss_s, ref_s, rtol=1e-4, atol=1e-6), (loss_s, ref_s)

    print("KERNEL_OK")
</pallas_src>

<mosaic_0001>
module attributes {stable_mosaic.version = 11 : i64} {
  func.func @_focal_sum_kernel(%arg0: i32, %arg1: i32, %arg2: memref<16x128xf32, #tpu.memory_space<vmem>>, %arg3: memref<16x128xf32, #tpu.memory_space<vmem>>, %arg4: memref<1x8x128xf32, #tpu.memory_space<vmem>>) attributes {dimension_semantics = [#tpu.dimension_semantics<parallel>, #tpu.dimension_semantics<arbitrary>], iteration_bounds = array<i64: 1, 1>, scalar_prefetch = 0 : i64, scratch_operands = 0 : i64, tpu.core_type = #tpu.core_type<tc>, window_params = [{transform_indices = @transform_0, window_bounds = array<i64: 16, 128>}, {transform_indices = @transform_1, window_bounds = array<i64: 16, 128>}, {transform_indices = @transform_2, window_bounds = array<i64: 1, 8, 128>}]} {
    %c0_i32 = arith.constant 0 : i32
    %0 = arith.cmpi eq, %arg1, %c0_i32 : i32
    %1 = arith.extui %0 : i1 to i32
    %c0_i32_0 = arith.constant 0 : i32
    %2 = arith.cmpi ne, %1, %c0_i32_0 : i32
    scf.if %2 {
      %cst_15 = arith.constant 0.000000e+00 : f32
      %31 = vector.broadcast %cst_15 : f32 to vector<1x8x128xf32>
      %c0_16 = arith.constant 0 : index
      %c0_17 = arith.constant 0 : index
      %c0_18 = arith.constant 0 : index
      %32 = vector.load %arg4[%c0_16, %c0_17, %c0_18] : memref<1x8x128xf32, #tpu.memory_space<vmem>>, vector<1x8x128xf32>
      tpu.vector_store %arg4[%c0_16, %c0_17, %c0_18], %31 {strides = array<i32>} : memref<1x8x128xf32, #tpu.memory_space<vmem>>, vector<1x8x128xf32>,
    } else {
    }
    %c0 = arith.constant 0 : index
    %c0_1 = arith.constant 0 : index
    %3 = vector.load %arg2[%c0, %c0_1] : memref<16x128xf32, #tpu.memory_space<vmem>>, vector<16x128xf32>
    %c0_2 = arith.constant 0 : index
    %c0_3 = arith.constant 0 : index
    %4 = vector.load %arg3[%c0_2, %c0_3] : memref<16x128xf32, #tpu.memory_space<vmem>>, vector<16x128xf32>
    %5 = math.absf %3 : vector<16x128xf32>
    %cst = arith.constant 0.000000e+00 : f32
    %6 = vector.broadcast %cst : f32 to vector<16x128xf32>
    %7 = arith.subf %6, %5 : vector<16x128xf32>
    %8 = math.exp %7 : vector<16x128xf32>
    %cst_4 = arith.constant 0.000000e+00 : f32
    %9 = vector.broadcast %cst_4 : f32 to vector<16x128xf32>
    %10 = arith.maximumf %3, %9 : vector<16x128xf32>
    %11 = arith.mulf %3, %4 : vector<16x128xf32>
    %12 = arith.subf %10, %11 : vector<16x128xf32>
    %13 = math.log1p %8 : vector<16x128xf32>
    %14 = arith.addf %12, %13 : vector<16x128xf32>
    %cst_5 = arith.constant 0.000000e+00 : f32
    %15 = vector.broadcast %cst_5 : f32 to vector<16x128xf32>
    %16 = arith.subf %15, %12 : vector<16x128xf32>
    %17 = math.exp %16 : vector<16x128xf32>
    %cst_6 = arith.constant 1.000000e+00 : f32
    %18 = vector.broadcast %cst_6 : f32 to vector<16x128xf32>
    %19 = arith.addf %18, %8 : vector<16x128xf32>
    %20 = arith.divf %17, %19 : vector<16x128xf32>
    %cst_7 = arith.constant 1.000000e+00 : f32
    %21 = vector.broadcast %cst_7 : f32 to vector<16x128xf32>
    %22 = arith.subf %21, %20 : vector<16x128xf32>
    %23 = arith.mulf %22, %22 : vector<16x128xf32>
    %24 = arith.mulf %23, %14 : vector<16x128xf32>
    %25 = vector.shape_cast %24 : vector<16x128xf32> to vector<2x8x128xf32>
    %cst_8 = arith.constant dense<0.000000e+00> : vector<8x128xf32>
    %26 = vector.multi_reduction <add>, %25, %cst_8 [0] : vector<2x8x128xf32> to vector<8x128xf32>
    %c0_9 = arith.constant 0 : index
    %c0_10 = arith.constant 0 : index
    %c0_11 = arith.constant 0 : index
    %27 = vector.load %arg4[%c0_9, %c0_10, %c0_11] : memref<1x8x128xf32, #tpu.memory_space<vmem>>, vector<1x8x128xf32>
    %28 = vector.shape_cast %26 : vector<8x128xf32> to vector<1x8x128xf32>
    %29 = arith.addf %27, %28 : vector<1x8x128xf32>
    %c0_12 = arith.constant 0 : index
    %c0_13 = arith.constant 0 : index
    %c0_14 = arith.constant 0 : index
    %30 = vector.load %arg4[%c0_12, %c0_13, %c0_14] : memref<1x8x128xf32, #tpu.memory_space<vmem>>, vector<1x8x128xf32>
    tpu.vector_store %arg4[%c0_12, %c0_13, %c0_14], %29 {strides = array<i32>} : memref<1x8x128xf32, #tpu.memory_space<vmem>>, vector<1x8x128xf32>,
    return
  }
  func.func @transform_0(%arg0: i32, %arg1: i32) -> (i32, i32) {
    %c1_i32 = arith.constant 1 : i32
    %0 = arith.muli %arg0, %c1_i32 : i32
    %1 = arith.addi %0, %arg1 : i32
    %c0_i32 = arith.constant 0 : i32
    %c0_i32_0 = arith.constant 0 : i32
    return %1, %c0_i32 : i32, i32
  }
  func.func @transform_1(%arg0: i32, %arg1: i32) -> (i32, i32) {
    %c1_i32 = arith.constant 1 : i32
    %0 = arith.muli %arg0, %c1_i32 : i32
    %1 = arith.addi %0, %arg1 : i32
    %c0_i32 = arith.constant 0 : i32
    %c0_i32_0 = arith.constant 0 : i32
    return %1, %c0_i32 : i32, i32
  }
  func.func @transform_2(%arg0: i32, %arg1: i32) -> (i32, i32, i32) {
    %c0_i32 = arith.constant 0 : i32
    %c0_i32_0 = arith.constant 0 : i32
    %c0_i32_1 = arith.constant 0 : i32
    return %arg0, %c0_i32, %c0_i32_0 : i32, i32, i32
  }
}

</mosaic_0001>

<llo_original>
// kernel: tpu_custom_call.1
$region0: #{tpu_custom_call.1}
  #allocation0 [shape = 'u32[]', space=smem, size = 0x4, offset = 0x4, fixed_abs, tag = 'smem constant byte address 0x4 - core index']
  #allocation1 [shape = 'u32[72,128]{1,0:T(1,128)}', space=vmem, size = 0x9000, scoped, tag = 'internal scratch']
  %s0 = inlined_call_operand.hbm [shape: f32[16,128], index: 0, kind: input, shape index: {}]
  %s1 = inlined_call_operand.hbm [shape: f32[16,128], index: 1, kind: input, shape index: {}]
  %s2 = inlined_call_operand.hbm [shape: f32[1,8,128], index: 2, kind: output, shape index: {}]
  %s3 = sld [smem:[#allocation0]]
  $region30: #{tpu_custom_call.1} parent=0
    _
  %s5 = ssub.s32 1, %s3
  %s6 = scalar_select 0, %s5, %s3
  $region1: #{tpu_custom_call.1} parent=0
    #allocation2 [shape = 'u8[8192]{0}', space=vmem, size = 0x2000, scoped, tag = 'input window, operand 0, single buffered']
    #allocation3 [shape = 's32[1]{0}', space=sflag, size = 0x4, scoped, tag = 'scoped memory for tpu_custom_call.1']
    #allocation4 [shape = 's32[1]{0}', space=sflag, size = 0x4, scoped, tag = 'scoped memory for tpu_custom_call.1']
    #allocation5 [shape = 'u8[8192]{0}', space=vmem, size = 0x2000, scoped, tag = 'input window, operand 1, single buffered']
    #allocation6 [shape = 's32[1]{0}', space=sflag, size = 0x4, scoped, tag = 'scoped memory for tpu_custom_call.1']
    #allocation7 [shape = 'u8[4096]{0}', space=vmem, size = 0x1000, scoped, tag = 'output window, operand 0, single buffered']
    %7 = vsyncpa [#allocation3], 0
    %8 = vsyncpa [#allocation6], 0
    %9 = vsyncpa [#allocation4], 0
    // Predicated region
    $region2: #{tpu_custom_call.1} parent=1 // pred_check
      _
    $region3: #{tpu_custom_call.1} parent=1 // pred_check_branch
      %11 = sbr.rel (0) target = $region5
    $region4: #{tpu_custom_call.1} parent=1 // pred_region
      %s12 = sadd.s32 0, 0
      %s13 = smul.u32 2, %s12
      %15 = vsyncadd [#allocation3], 0
      %s16 = smul.addr %s13, 8
      %s17 = scalar_lea.hbm %s0, %s16
      %s18 = sshll.u32 %s17, 4
      %s19 = int_to_ptr.hbm [resolvable:$true] %s18
      %s20 = sshll.u32 [#allocation2], 4
      %s21 = int_to_ptr.vmem [resolvable:$true] %s20
      %26 = dma.hbm_to_vmem [thread:$0]  %s19, 256, %s21, [#allocation3], 128, 128, 8
    $region5: #{tpu_custom_call.1} parent=1 // pred_fallthru
      _
    // Predicated region
    $region6: #{tpu_custom_call.1} parent=1 // pred_check
      _
    $region7: #{tpu_custom_call.1} parent=1 // pred_check_branch
      %28 = sbr.rel (0) target = $region9
    $region8: #{tpu_custom_call.1} parent=1 // pred_region
      %s29 = sadd.s32 0, 0
      %s30 = smul.u32 2, %s29
      %32 = vsyncadd [#allocation6], 0
      %s33 = smul.addr %s30, 8
      %s34 = scalar_lea.hbm %s1, %s33
      %s35 = sshll.u32 %s34, 4
      %s36 = int_to_ptr.hbm [resolvable:$true] %s35
      %s37 = sshll.u32 [#allocation5], 4
      %s38 = int_to_ptr.vmem [resolvable:$true] %s37
      %43 = dma.hbm_to_vmem [thread:$0]  %s36, 256, %s38, [#allocation6], 128, 128, 8
    $region9: #{tpu_custom_call.1} parent=1 // pred_fallthru
      _
    // Predicated region
    $region10: #{tpu_custom_call.1} parent=1 // pred_check
      _
    $region11: #{tpu_custom_call.1} parent=1 // pred_check_branch
      %45 = sbr.rel (0) target = $region13
    $region12: #{tpu_custom_call.1} parent=1 // pred_region
      %47 = dma.done [#allocation3], 256
    $region13: #{tpu_custom_call.1} parent=1 // pred_fallthru
      _
    // Predicated region
    $region14: #{tpu_custom_call.1} parent=1 // pred_check
      _
    $region15: #{tpu_custom_call.1} parent=1 // pred_check_branch
      %49 = sbr.rel (0) target = $region17
    $region16: #{tpu_custom_call.1} parent=1 // pred_region
      %51 = dma.done [#allocation6], 256
    $region17: #{tpu_custom_call.1} parent=1 // pred_fallthru
      _
    %s52 = sadd.s32 0, 0
    %s53 = smul.u32 2, %s52
    %s54 = sadd.s32 0, 0
    %s55 = smul.u32 2, %s54
    %p56 = scmp.eq.s32.totalorder 0, 0
    // Predicated region
    $region18: #{tpu_custom_call.1} parent=1 // pred_check
      %p57 = pneg %p56
    $region19: #{tpu_custom_call.1} parent=1 // pred_check_branch
      %59 = sbr.rel (%p57) target = $region21
    $region20: #{tpu_custom_call.1} parent=1 // pred_region
      %60 = vst [vmem:[#allocation7] sm:$0xff] 0.0
    $region21: #{tpu_custom_call.1} parent=1 // pred_fallthru
      _
    %v61 = vld [vmem:[#allocation2] sm:$0xff]
    %v62 = vld [vmem:[#allocation2 + $0x8] sm:$0xff]
    %v63 = vld [vmem:[#allocation5] sm:$0xff]
    %v64 = vld [vmem:[#allocation5 + $0x8] sm:$0xff]
    %v65 = vand.u32 2147483647, %v61
    %v66 = vand.u32 2147483647, %v62
    %v67 = vsub.f32 0.0, %v65
    %v68 = vsub.f32 0.0, %v66
    %v69 = vmul.f32 %v67, 1.442695
    %v70 = vpow.pop %v69
    %v71 = vmul.f32 %v68, 1.442695
    %v72 = vpow.pop %v71
    %v73 = vmax.f32 %v61, 0.0
    %v74 = vmax.f32 %v62, 0.0
    %v75 = vmul.f32 %v61, %v63
    %v76 = vmul.f32 %v62, %v64
    %v77 = vsub.f32 %v73, %v75
    %v78 = vsub.f32 %v74, %v76
    %v79 = vadd.f32 %v70, 1.0
    %v80 = vlog2.pop %v79
    %v81 = vmul.f32 %v80, 0.6931472
    %v82 = vmul.f32 -0.5, %v70
    %v83 = vadd.f32 %v82, 1.0
    %v84 = vmul.f32 %v83, %v70
    %v85 = vand.u32 2147483647, %v70
    %vm86 = vcmp.lt.f32.partialorder %v85, 0.0004427343
    %v87 = vsel %vm86, %v84, %v81
    %v88 = vadd.f32 %v72, 1.0
    %v89 = vlog2.pop %v88
    %v90 = vmul.f32 %v89, 0.6931472
    %v91 = vmul.f32 -0.5, %v72
    %v92 = vadd.f32 %v91, 1.0
    %v93 = vmul.f32 %v92, %v72
    %v94 = vand.u32 2147483647, %v72
    %vm95 = vcmp.lt.f32.partialorder %v94, 0.0004427343
    %v96 = vsel %vm95, %v93, %v90
    %v97 = vadd.f32 %v77, %v87
    %v98 = vadd.f32 %v78, %v96
    %v99 = vsub.f32 0.0, %v77
    %v100 = vsub.f32 0.0, %v78
    %v101 = vmul.f32 %v99, 1.442695
    %v102 = vpow.pop %v101
    %v103 = vmul.f32 %v100, 1.442695
    %v104 = vpow.pop %v103
    %v105 = vadd.f32 %v70, 1.0
    %v106 = vadd.f32 %v72, 1.0
    %v107 = vrcp.pop %v105
    %v108 = vmul.f32 %v105, %v107
    %v109 = vsub.f32 1.0, %v108
    %v110 = vmul.f32 %v107, %v109
    %v111 = vadd.f32 %v107, %v110
    %vm112 = vweird.f32 %v105
    %vm113 = vweird.f32 %v107
    %vm114 = vmor %vm112, %vm113
    %v115 = vsel %vm114, %v107, %v111
    %v116 = vand.u32 2147483647, %v105
    %vm117 = vcmp.eq.f32.partialorder %v116, 8.507059e+37
    %v118 = vand.u32 %v105, 2147483648
    %v119 = vor.u32 1.1754944e-38, %v118
    %v120 = vsel %vm117, %v119, %v115
    %v121 = vmul.f32 %v102, %v120
    %v122 = vrcp.pop %v106
    %v123 = vmul.f32 %v106, %v122
    %v124 = vsub.f32 1.0, %v123
    %v125 = vmul.f32 %v122, %v124
    %v126 = vadd.f32 %v122, %v125
    %vm127 = vweird.f32 %v106
    %vm128 = vweird.f32 %v122
    %vm129 = vmor %vm127, %vm128
    %v130 = vsel %vm129, %v122, %v126
    %v131 = vand.u32 2147483647, %v106
    %vm132 = vcmp.eq.f32.partialorder %v131, 8.507059e+37
    %v133 = vand.u32 %v106, 2147483648
    %v134 = vor.u32 1.1754944e-38, %v133
    %v135 = vsel %vm132, %v134, %v130
    %v136 = vmul.f32 %v104, %v135
    %v137 = vsub.f32 1.0, %v121
    %v138 = vsub.f32 1.0, %v136
    %v139 = vmul.f32 %v137, %v137
    %v140 = vmul.f32 %v138, %v138
    %v141 = vmul.f32 %v139, %v97
    %v142 = vmul.f32 %v140, %v98
    %v143 = vadd.f32 %v141, %v142
    %v144 = vld [vmem:[#allocation7] sm:$0xff]
    %v145 = vadd.f32 %v144, %v143
    %146 = vst [vmem:[#allocation7] sm:$0xff] %v145
    // Predicated region
    $region22: #{tpu_custom_call.1} parent=1 // pred_check
      _
    $region23: #{tpu_custom_call.1} parent=1 // pred_check_branch
      %148 = sbr.rel (0) target = $region25
    $region24: #{tpu_custom_call.1} parent=1 // pred_region
      %150 = vsyncadd [#allocation4], 0
      %s152 = sshll.u32 [#allocation7], 4
      %s153 = int_to_ptr.vmem [resolvable:$true] %s152
      %s154 = sshll.u32 %s2, 4
      %s155 = int_to_ptr.hbm [resolvable:$true] %s154
      %157 = dma.vmem_to_hbm [thread:$0]  %s153, 128, %s155, [#allocation4]
    $region25: #{tpu_custom_call.1} parent=1 // pred_fallthru
      _
    // Predicated region
    $region26: #{tpu_custom_call.1} parent=1 // pred_check
      _
    $region27: #{tpu_custom_call.1} parent=1 // pred_check_branch
      %159 = sbr.rel (0) target = $region29
    $region28: #{tpu_custom_call.1} parent=1 // pred_region
      %161 = dma.done [#allocation4], 128
    $region29: #{tpu_custom_call.1} parent=1 // pred_fallthru
      _
    %162 = vsyncpa [#allocation3], 1
    %163 = vsyncpa [#allocation6], 1
    %164 = vsyncpa [#allocation4], 1

</llo_original>
